<compile_context>
chip_gen: v6e
topology: v6e:2x2x1
jax: 0.10.0
libtpu: 0.0.40
codegen_flags: <defaults>
</compile_context>

<pallas_src>
import jax
import jax.numpy as jnp
from jax import lax
from jax.experimental import pallas as pl
from jax.experimental.pallas import tpu as pltpu


# ----------------------------- tuning knobs -----------------------------
_ONE_HOT_TOKEN_TILE = 256       # one-hot transient scales with TB*V -> keep moderate
_TAKE_TOKEN_TILE = 512          # HBM-write-bound path: bigger tiles ~85% of roofline
_FALLBACK_ROWS_PER_STEP = 32    # K concurrent row DMAs per grid step (HBM path)
_VMEM_HEADROOM = 4 << 20
_VMEM_LIMIT_FLOOR = 32 << 20    # never request less scoped VMEM than the v6e default


def _round_up(n: int, m: int) -> int:
    return ((n + m - 1) // m) * m


def _vmem_capacity_bytes() -> int:
    """Per-TensorCore VMEM capacity (generation-aware), conservative default."""
    try:
        cap = int(getattr(pltpu.get_tpu_info(), "vmem_capacity_bytes", 0))
        if cap > 0:
            return cap
    except Exception:
        pass
    return 64 << 20   # v7x per-TC size; a safe lower bound for v5e/v6e as well


def _one_hot_max_v(dtype) -> int:
    # A 0/1 one-hot in bf16 is exact and runs at full bf16 MXU rate; for f32 weights
    # the crossover from HBM-write-bound to MXU-bound is much lower (worst on v5e).
    return 512 if dtype == jnp.bfloat16 else 256


# ------------------------------- kernels --------------------------------
def _embed_onehot_kernel(ids_ref, w_ref, out_ref):
    """Small-V gather: one-hot (TB, V) @ (V, D) MXU matmul against the resident table."""
    ids = ids_ref[...]                                   # (TB, 1) int32
    tb = out_ref.shape[0]
    v = w_ref.shape[0]
    one_hot = (ids == lax.broadcasted_iota(jnp.int32, (tb, v), 1)).astype(w_ref.dtype)
    # NOTE: for f32 weights Mosaic's f32 matmul strategy reproduces the rows to f32
    # accuracy here; if a guaranteed bit-exact gather is required, use the row-copy
    # path instead (set the one-hot cutoff to 0).
    out_ref[...] = jnp.dot(
        one_hot, w_ref[...], preferred_element_type=jnp.float32
    ).astype(out_ref.dtype)


def _embed_take_kernel(ids_ref, w_ref, out_ref):
    """Medium-V gather: SMEM token ids -> loop of (1, D) row copies from the
    VMEM-resident table.  Cost scales with TB*D, independent of V."""
    i = pl.program_id(0)
    tb = out_ref.shape[0]

    def body(t, carry):
        idx = ids_ref[i * tb + t]                        # cheap scalar read from SMEM
        out_ref[pl.ds(t, 1), :] = w_ref[pl.ds(idx, 1), :]
        return carry

    lax.fori_loop(0, tb, body, 0, unroll=8)


def _embed_hbm_gather_kernel(ids_ref, w_hbm, out_ref, row_buf, row_sem):
    """Large-V fallback: K concurrent row DMAs from the HBM-resident table per step."""
    i = pl.program_id(0)
    k_rows = out_ref.shape[0]

    def start(k, carry):
        idx = ids_ref[i * k_rows + k]
        pltpu.make_async_copy(w_hbm.at[pl.ds(idx, 1), :],
                              row_buf.at[pl.ds(k, 1), :],
                              row_sem.at[k]).start()
        return carry

    lax.fori_loop(0, k_rows, start, 0, unroll=True)       # K row fetches in flight

    def wait(k, carry):
        pltpu.make_async_copy(w_hbm.at[pl.ds(0, 1), :],
                              row_buf.at[pl.ds(k, 1), :],
                              row_sem.at[k]).wait()
        return carry

    lax.fori_loop(0, k_rows, wait, 0, unroll=True)
    out_ref[...] = row_buf[...]
    # TODO(synk): double-buffer row_buf across grid steps (prefetch step i+1's rows
    # while this step's output block is written back) for full latency hiding.


# ---------------------------- pallas_call builders ----------------------------
def _resident_pallas_call(weight, ids_padded, n_tokens, tb, use_onehot, vmem_cap,
                          table_buffers):
    V, D = weight.shape
    elt = weight.dtype.itemsize
    grid = (ids_padded.shape[0] // tb,)

    # -------- scoped-VMEM accounting (table + tiles + one-hot transient) --------
    table_alloc = table_buffers * V * D * elt
    out_tiles = 2 * tb * D * elt                          # double-buffered output tile
    if use_onehot:
        ids_tiles = 2 * tb * 128 * 4                      # (tb, 1) i32 lane-pads to (tb, 128)
        transient = 2 * tb * max(V, 128) * 4              # f32 one-hot + iota
    else:
        ids_tiles = 0                                     # ids live in SMEM (scalar prefetch)
        transient = 0
    vmem_needed = table_alloc + out_tiles + ids_tiles + transient + _VMEM_HEADROOM
    vmem_limit = int(min(max(vmem_needed, _VMEM_LIMIT_FLOOR), vmem_cap - (2 << 20)))

    cost = pl.CostEstimate(
        flops=2 * grid[0] * tb * V * D if use_onehot else 0,
        transcendentals=0,
        bytes_accessed=V * D * elt + int(ids_padded.size) * 4 + n_tokens * D * elt,
    )
    cparams = pltpu.CompilerParams(
        dimension_semantics=("parallel",),   # independent token tiles; shards over v7x TCs
        vmem_limit_bytes=vmem_limit,
    )
    out_shape = jax.ShapeDtypeStruct((n_tokens, D), weight.dtype)
    # Constant index_map -> table fetched once; Buffered(1) keeps a single VMEM copy.
    table_kwargs = {"pipeline_mode": pl.Buffered(1)} if table_buffers == 1 else {}

    if use_onehot:
        table_spec = pl.BlockSpec((V, D), lambda i: (0, 0), **table_kwargs)
        return pl.pallas_call(
            _embed_onehot_kernel,
            out_shape=out_shape,
            grid_spec=pl.GridSpec(
                grid=grid,
                in_specs=[pl.BlockSpec((tb, 1), lambda i: (i, 0)), table_spec],
                out_specs=pl.BlockSpec((tb, D), lambda i: (i, 0)),
            ),
            compiler_params=cparams,
            cost_estimate=cost,
        )(ids_padded.reshape(-1, 1), weight)

    table_spec = pl.BlockSpec((V, D), lambda i, ids_ref: (0, 0), **table_kwargs)
    return pl.pallas_call(
        _embed_take_kernel,
        out_shape=out_shape,
        grid_spec=pltpu.PrefetchScalarGridSpec(
            num_scalar_prefetch=1,            # whole ids array lands in SMEM
            grid=grid,
            in_specs=[table_spec],
            out_specs=pl.BlockSpec((tb, D), lambda i, ids_ref: (i, 0)),
        ),
        compiler_params=cparams,
        cost_estimate=cost,
    )(ids_padded, weight)


def _hbm_gather_pallas_call(weight, ids, n_tokens, vmem_cap):
    V, D = weight.shape
    elt = weight.dtype.itemsize
    k_rows = min(_FALLBACK_ROWS_PER_STEP, _round_up(n_tokens, 8))
    n_pad = _round_up(n_tokens, k_rows)
    ids_padded = jnp.pad(ids, (0, n_pad - n_tokens))      # padded ids are 0 (valid row)
    grid = (n_pad // k_rows,)

    vmem_needed = 3 * k_rows * D * elt + _VMEM_HEADROOM
    vmem_limit = int(min(max(vmem_needed, _VMEM_LIMIT_FLOOR), vmem_cap - (2 << 20)))

    # TODO(synk): chunk very large N - the scalar-prefetched ids pad to
    # next_pow2(4*N) bytes of SMEM.
    return pl.pallas_call(
        _embed_hbm_gather_kernel,
        out_shape=jax.ShapeDtypeStruct((n_tokens, D), weight.dtype),
        grid_spec=pltpu.PrefetchScalarGridSpec(
            num_scalar_prefetch=1,
            grid=grid,
            in_specs=[pl.BlockSpec(memory_space=pl.ANY)],   # table stays in HBM
            out_specs=pl.BlockSpec((k_rows, D), lambda i, ids_ref: (i, 0)),
            scratch_shapes=[pltpu.VMEM((k_rows, D), weight.dtype),
                            pltpu.SemaphoreType.DMA((k_rows,))],
        ),
        compiler_params=pltpu.CompilerParams(
            dimension_semantics=("parallel",),   # steps independent; shards on v7x
            vmem_limit_bytes=vmem_limit,
        ),
        cost_estimate=pl.CostEstimate(
            flops=0, transcendentals=0,
            bytes_accessed=2 * n_tokens * D * elt + n_tokens * 4),
    )(ids_padded, weight)


# -------------------------------- wrapper --------------------------------
def embedding_forward(weight: jax.Array, x: jax.Array, *,
                      _force_hbm_gather: bool = False) -> jax.Array:
    """Pallas equivalent of `Embedding.forward`: returns weight[x]."""
    V, D = weight.shape
    orig_shape = x.shape
    # PyTorch raises on out-of-range ids; clamp so a bad id can never address
    # memory outside the table (documented divergence from nn.Embedding).
    ids = jnp.clip(x.reshape(-1).astype(jnp.int32), 0, V - 1)
    N = int(ids.shape[0])
    if N == 0:
        return jnp.zeros((*orig_shape, D), weight.dtype)

    elt = weight.dtype.itemsize
    table_bytes = V * D * elt
    vmem_cap = _vmem_capacity_bytes()

    # Generation-aware resident-table budget (single-buffered table + tiles +
    # transient + headroom): ~40 MiB on v7x (64 MiB VMEM/TC), ~104 MiB on v5e/v6e
    # (128 MiB).  On v7x each TensorCore keeps its own copy under "parallel"
    # semantics, so this is a per-TC budget; storing the table in bf16 doubles the
    # vocabulary that stays resident.
    resident_limit_1buf = vmem_cap - (24 << 20)
    resident_limit_2buf = (vmem_cap - (16 << 20)) // 2

    if _force_hbm_gather or table_bytes > resident_limit_1buf:
        out_flat = _hbm_gather_pallas_call(weight, ids, N, vmem_cap)
        return out_flat.reshape(*orig_shape, D)

    use_onehot = V <= _one_hot_max_v(weight.dtype)
    tb = min(_ONE_HOT_TOKEN_TILE if use_onehot else _TAKE_TOKEN_TILE, _round_up(N, 8))
    n_pad = _round_up(N, tb)
    # Pad the (cheap, 4 B/token) ids instead of slicing the (N, D) output afterwards.
    ids_padded = jnp.pad(ids, (0, n_pad - N))

    try:
        # Preferred: single-buffered resident table.
        out_flat = _resident_pallas_call(weight, ids_padded, N, tb, use_onehot,
                                         vmem_cap, table_buffers=1)
    except Exception:
        # pl.Buffered(1) unavailable/rejected on this JAX version: retry with the
        # default double-buffered table if it still fits, else go to the HBM path.
        if table_bytes <= resident_limit_2buf:
            out_flat = _resident_pallas_call(weight, ids_padded, N, tb, use_onehot,
                                             vmem_cap, table_buffers=2)
        else:
            out_flat = _hbm_gather_pallas_call(weight, ids, N, vmem_cap)

    return out_flat.reshape(*orig_shape, D)


if __name__ == "__main__":
    key = jax.random.PRNGKey(0)
    k_w1, k_x1, k_w2, k_x2 = jax.random.split(key, 4)
    batch, seq = 2, 8

    # ---- Path 1: small vocab -> VMEM-resident table, one-hot MXU gather ----
    V1, D1 = 64, 128
    w1 = jax.random.normal(k_w1, (V1, D1), dtype=jnp.float32)  # ~ nn.Parameter(t.randn(V, D))
    x1 = jax.random.randint(k_x1, (batch, seq), 0, V1, dtype=jnp.int32)
    out1 = jax.block_until_ready(embedding_forward(w1, x1))
    assert out1.shape == (batch, seq, D1), out1.shape
    assert jnp.allclose(out1, w1[x1]), "one-hot resident path mismatch"

    # ---- Path 2: medium vocab -> VMEM-resident table, SMEM-ids row-copy gather ----
    V2, D2 = 512, 128
    w2 = jax.random.normal(k_w2, (V2, D2), dtype=jnp.float32)
    x2 = jax.random.randint(k_x2, (batch, seq), 0, V2, dtype=jnp.int32)
    out2 = jax.block_until_ready(embedding_forward(w2, x2))
    assert out2.shape == (batch, seq, D2), out2.shape
    assert jnp.allclose(out2, w2[x2]), "row-copy resident path mismatch"

    # ---- Path 3: HBM-resident table fallback (forced; K row DMAs per grid step) ----
    out3 = jax.block_until_ready(embedding_forward(w2, x2, _force_hbm_gather=True))
    assert jnp.allclose(out3, w2[x2]), "HBM-gather fallback path mismatch"

    print("KERNEL_OK")
</pallas_src>

<mosaic_0001>
module attributes {stable_mosaic.version = 11 : i64} {
  func.func @_embed_onehot_kernel(%arg0: i32, %arg1: memref<16x1xi32, #tpu.memory_space<vmem>>, %arg2: memref<64x128xf32, #tpu.memory_space<vmem>>, %arg3: memref<16x128xf32, #tpu.memory_space<vmem>>) attributes {dimension_semantics = [#tpu.dimension_semantics<parallel>], iteration_bounds = array<i64: 1>, scalar_prefetch = 0 : i64, scratch_operands = 0 : i64, tpu.core_type = #tpu.core_type<tc>, window_params = [{transform_indices = @transform_0, window_bounds = array<i64: 16, 1>}, {pipeline_mode = #tpu.pipeline_mode<synchronous>, transform_indices = @transform_1, window_bounds = array<i64: 64, 128>}, {transform_indices = @transform_2, window_bounds = array<i64: 16, 128>}]} {
    %c0 = arith.constant 0 : index
    %c0_0 = arith.constant 0 : index
    %0 = vector.load %arg1[%c0, %c0_0] : memref<16x1xi32, #tpu.memory_space<vmem>>, vector<16x1xi32>
    %1 = tpu.iota {dimensions = array<i32: 1>} : vector<16x64xi32>
    %2 = vector.broadcast %0 : vector<16x1xi32> to vector<16x64xi32>
    %3 = arith.cmpi eq, %2, %1 : vector<16x64xi32>
    %4 = arith.extui %3 : vector<16x64xi1> to vector<16x64xi32>
    %5 = arith.sitofp %4 : vector<16x64xi32> to vector<16x64xf32>
    %c0_1 = arith.constant 0 : index
    %c0_2 = arith.constant 0 : index
    %6 = vector.load %arg2[%c0_1, %c0_2] : memref<64x128xf32, #tpu.memory_space<vmem>>, vector<64x128xf32>
    %cst = arith.constant dense<0.000000e+00> : vector<16x128xf32>
    %7 = tpu.matmul %5, %6, %cst {dimension_numbers = #tpu.dot_dimension_numbers<[1], [0], [0], [1], [0, 0, 1, 1], [], []>} : vector<16x64xf32>, vector<64x128xf32>, vector<16x128xf32> -> vector<16x128xf32>
    %c0_3 = arith.constant 0 : index
    %c0_4 = arith.constant 0 : index
    %8 = vector.load %arg3[%c0_3, %c0_4] : memref<16x128xf32, #tpu.memory_space<vmem>>, vector<16x128xf32>
    tpu.vector_store %arg3[%c0_3, %c0_4], %7 {strides = array<i32>} : memref<16x128xf32, #tpu.memory_space<vmem>>, vector<16x128xf32>,
    return
  }
  func.func @transform_0(%arg0: i32) -> (i32, i32) {
    %c0_i32 = arith.constant 0 : i32
    %c0_i32_0 = arith.constant 0 : i32
    return %arg0, %c0_i32 : i32, i32
  }
  func.func @transform_1(%arg0: i32) -> (i32, i32) {
    %c0_i32 = arith.constant 0 : i32
    %c0_i32_0 = arith.constant 0 : i32
    %c0_i32_1 = arith.constant 0 : i32
    return %c0_i32, %c0_i32_0 : i32, i32
  }
  func.func @transform_2(%arg0: i32) -> (i32, i32) {
    %c0_i32 = arith.constant 0 : i32
    %c0_i32_0 = arith.constant 0 : i32
    return %arg0, %c0_i32 : i32, i32
  }
}

module attributes {stable_mosaic.version = 11 : i64} {
  func.func @_embed_onehot_kernel(%arg0: i32, %arg1: memref<16x1xi32, #tpu.memory_space<vmem>>, %arg2: memref<64x128xf32, #tpu.memory_space<vmem>>, %arg3: memref<16x128xf32, #tpu.memory_space<vmem>>) attributes {dimension_semantics = [#tpu.dimension_semantics<parallel>], iteration_bounds = array<i64: 1>, scalar_prefetch = 0 : i64, scratch_operands = 0 : i64, tpu.core_type = #tpu.core_type<tc>, window_params = [{transform_indices = @transform_0, window_bounds = array<i64: 16, 1>}, {pipeline_mode = #tpu.pipeline_mode<synchronous>, transform_indices = @transform_1, window_bounds = array<i64: 64, 128>}, {transform_indices = @transform_2, window_bounds = array<i64: 16, 128>}]} {
    %c0 = arith.constant 0 : index
    %c0_0 = arith.constant 0 : index
    %0 = vector.load %arg1[%c0, %c0_0] : memref<16x1xi32, #tpu.memory_space<vmem>>, vector<16x1xi32>
    %1 = tpu.iota {dimensions = array<i32: 1>} : vector<16x64xi32>
    %2 = vector.broadcast %0 : vector<16x1xi32> to vector<16x64xi32>
    %3 = arith.cmpi eq, %2, %1 : vector<16x64xi32>
    %4 = arith.extui %3 : vector<16x64xi1> to vector<16x64xi32>
    %5 = arith.sitofp %4 : vector<16x64xi32> to vector<16x64xf32>
    %c0_1 = arith.constant 0 : index
    %c0_2 = arith.constant 0 : index
    %6 = vector.load %arg2[%c0_1, %c0_2] : memref<64x128xf32, #tpu.memory_space<vmem>>, vector<64x128xf32>
    %cst = arith.constant dense<0.000000e+00> : vector<16x128xf32>
    %7 = tpu.matmul %5, %6, %cst {dimension_numbers = #tpu.dot_dimension_numbers<[1], [0], [0], [1], [0, 0, 1, 1], [], []>} : vector<16x64xf32>, vector<64x128xf32>, vector<16x128xf32> -> vector<16x128xf32>
    %c0_3 = arith.constant 0 : index
    %c0_4 = arith.constant 0 : index
    %8 = vector.load %arg3[%c0_3, %c0_4] : memref<16x128xf32, #tpu.memory_space<vmem>>, vector<16x128xf32>
    tpu.vector_store %arg3[%c0_3, %c0_4], %7 {strides = array<i32>} : memref<16x128xf32, #tpu.memory_space<vmem>>, vector<16x128xf32>,
    return
  }
  func.func @transform_0(%arg0: i32) -> (i32, i32) {
    %c0_i32 = arith.constant 0 : i32
    %c0_i32_0 = arith.constant 0 : i32
    return %arg0, %c0_i32 : i32, i32
  }
  func.func @transform_1(%arg0: i32) -> (i32, i32) {
    %c0_i32 = arith.constant 0 : i32
    %c0_i32_0 = arith.constant 0 : i32
    %c0_i32_1 = arith.constant 0 : i32
    return %c0_i32, %c0_i32_0 : i32, i32
  }
  func.func @transform_2(%arg0: i32) -> (i32, i32) {
    %c0_i32 = arith.constant 0 : i32
    %c0_i32_0 = arith.constant 0 : i32
    return %arg0, %c0_i32 : i32, i32
  }
}

</mosaic_0001>

<llo_original>
// kernel: tpu_custom_call.1
$region0: #{tpu_custom_call.1}
  #allocation0 [shape = 'u32[]', space=smem, size = 0x4, offset = 0x4, fixed_abs, tag = 'smem constant byte address 0x4 - core index']
  #allocation1 [shape = 'u32[144,128]{1,0:T(1,128)}', space=vmem, size = 0x12000, scoped, tag = 'internal scratch']
  %s0 = inlined_call_operand.vmem [shape: s32[16,1], index: 0, kind: input, shape index: {}]
  %s1 = inlined_call_operand.hbm [shape: f32[64,128], index: 1, kind: input, shape index: {}]
  %s2 = inlined_call_operand.hbm [shape: f32[16,128], index: 2, kind: output, shape index: {}]
  %s3 = sld [smem:[#allocation0]]
  $region22: #{tpu_custom_call.1} parent=0
    _
  %s5 = ssub.s32 1, %s3
  %s6 = scalar_select 0, %s5, %s3
  $region1: #{tpu_custom_call.1} parent=0
    #allocation2 [shape = 'u8[32768]{0}', space=vmem, size = 0x8000, scoped, tag = 'input window, operand 1, single buffered']
    #allocation3 [shape = 's32[1]{0}', space=sflag, size = 0x4, scoped, tag = 'scoped memory for tpu_custom_call.1']
    #allocation4 [shape = 's32[1]{0}', space=sflag, size = 0x4, scoped, tag = 'scoped memory for tpu_custom_call.1']
    #allocation5 [shape = 'u8[8192]{0}', space=vmem, size = 0x2000, scoped, tag = 'output window, operand 0, single buffered']
    %7 = vsyncpa [#allocation3], 0
    %8 = vsyncpa [#allocation4], 0
    // Predicated region
    $region2: #{tpu_custom_call.1} parent=1 // pred_check
      _
    $region3: #{tpu_custom_call.1} parent=1 // pred_check_branch
      %10 = sbr.rel (0) target = $region5
    $region4: #{tpu_custom_call.1} parent=1 // pred_region
      _
    $region5: #{tpu_custom_call.1} parent=1 // pred_fallthru
      _
    // Predicated region
    $region6: #{tpu_custom_call.1} parent=1 // pred_check
      _
    $region7: #{tpu_custom_call.1} parent=1 // pred_check_branch
      %12 = sbr.rel (0) target = $region9
    $region8: #{tpu_custom_call.1} parent=1 // pred_region
      %s14 = ssub.s32 1024, 1024
      %15 = vsyncadd [#allocation3], %s14
      %s16 = sshll.u32 [#allocation2], 4
      %s17 = int_to_ptr.vmem [resolvable:$true] %s16
      %22 = dma.hbm_to_vmem [thread:$0]  %s1, 1024, %s17, [#allocation3], 128, 128, 8
    $region9: #{tpu_custom_call.1} parent=1 // pred_fallthru
      _
    // Predicated region
    $region10: #{tpu_custom_call.1} parent=1 // pred_check
      _
    $region11: #{tpu_custom_call.1} parent=1 // pred_check_branch
      %24 = sbr.rel (0) target = $region13
    $region12: #{tpu_custom_call.1} parent=1 // pred_region
      %25 = dma.done [#allocation3], 1024
    $region13: #{tpu_custom_call.1} parent=1 // pred_fallthru
      _
    %v26 = vld [vmem:[%s0] sm:$0xff]
    %v27 = vld [vmem:[%s0 + $0x8] sm:$0xff]
    %v28 = vlaneseq
    %v29 = vand.u32 %v28, 127
    %30 = vset.pattern.permute.xlu0 0
    %31 = vperm.xlu0 %30, %v26
    %v32 = vpop.permute.xlu0 %31
    %33 = vset.pattern.permute.xlu0 0
    %34 = vperm.xlu0 %33, %v27
    %v35 = vpop.permute.xlu0 %34
    %vm36 = vcmp.eq.s32.totalorder %v32, %v29
    %vm37 = vcmp.eq.s32.totalorder %v35, %v29
    %v38 = vsel %vm36, 1, 0
    %v39 = vsel %vm37, 1, 0
    %v40 = vcvt.s32.f32 %v38
    %v41 = vcvt.s32.f32 %v39
    %v42 = vld [vmem:[#allocation2] sm:$0xff]
    %v43 = vld [vmem:[#allocation2 + $0x8] sm:$0xff]
    %v44 = vld [vmem:[#allocation2 + $0x10] sm:$0xff]
    %v45 = vld [vmem:[#allocation2 + $0x18] sm:$0xff]
    %v46 = vld [vmem:[#allocation2 + $0x20] sm:$0xff]
    %v47 = vld [vmem:[#allocation2 + $0x28] sm:$0xff]
    %v48 = vld [vmem:[#allocation2 + $0x30] sm:$0xff]
    %v49 = vld [vmem:[#allocation2 + $0x38] sm:$0xff]
    %vm50 = vcmask 523264
    %v52 = vsel %vm50, %v40, 0
    %v55 = vsel %vm50, %v41, 0
    %57 = vmatprep.subr.mxu0 0.0
    %58 = vmatpush1.msra.mxu0 0.0
    %59 = vmatprep.subr.mxu0 0.0
    %60 = vmatpush1.msra.mxu0 0.0
    %61 = vmatprep.subr.mxu0 0.0
    %62 = vmatpush1.msra.mxu0 0.0
    %63 = vmatprep.subr.mxu0 0.0
    %64 = vmatpush1.msra.mxu0 0.0
    %65 = vmatprep.subr.mxu0 0.0
    %66 = vmatpush1.msra.mxu0 0.0
    %67 = vmatprep.subr.mxu0 0.0
    %68 = vmatpush1.msra.mxu0 0.0
    %69 = vmatprep.subr.mxu0 0.0
    %70 = vmatpush1.msra.mxu0 0.0
    %71 = vmatprep.subr.mxu0 0.0
    %72 = vmatpush1.msra.mxu0 0.0
    %73 = vmatprep.subr.mxu0 0.0
    %74 = vmatpush1.msra.mxu0 %v49
    %75 = vmatprep.subr.mxu0 0.0
    %76 = vmatpush1.msra.mxu0 %v48
    %77 = vmatprep.subr.mxu0 0.0
    %78 = vmatpush1.msra.mxu0 %v47
    %79 = vmatprep.subr.mxu0 0.0
    %80 = vmatpush1.msra.mxu0 %v46
    %81 = vmatprep.subr.mxu0 0.0
    %82 = vmatpush1.msra.mxu0 %v45
    %83 = vmatprep.subr.mxu0 0.0
    %84 = vmatpush1.msra.mxu0 %v44
    %85 = vmatprep.subr.mxu0 0.0
    %86 = vmatpush1.msra.mxu0 %v43
    %87 = vmatprep.subr.mxu0 0.0
    %88 = vmatpush1.msra.mxu0 %v42
    %89 = vmatprep.subr.mxu0 0.0
    %90 = vmatpush2.msra.mxu0 0.0
    %91 = vmatprep.subr.mxu0 0.0
    %92 = vmatpush2.msra.mxu0 0.0
    %93 = vmatprep.subr.mxu0 0.0
    %94 = vmatpush2.msra.mxu0 0.0
    %95 = vmatprep.subr.mxu0 0.0
    %96 = vmatpush2.msra.mxu0 0.0
    %97 = vmatprep.subr.mxu0 0.0
    %98 = vmatpush2.msra.mxu0 0.0
    %99 = vmatprep.subr.mxu0 0.0
    %100 = vmatpush2.msra.mxu0 0.0
    %101 = vmatprep.subr.mxu0 0.0
    %102 = vmatpush2.msra.mxu0 0.0
    %103 = vmatprep.subr.mxu0 0.0
    %104 = vmatpush2.msra.mxu0 0.0
    %105 = vmatprep.subr.mxu0 0.0
    %106 = vmatpush2.msra.mxu0 0.0
    %107 = vmatprep.subr.mxu0 0.0
    %108 = vmatpush2.msra.mxu0 0.0
    %109 = vmatprep.subr.mxu0 0.0
    %110 = vmatpush2.msra.mxu0 0.0
    %111 = vmatprep.subr.mxu0 0.0
    %112 = vmatpush2.msra.mxu0 0.0
    %113 = vmatprep.subr.mxu0 0.0
    %114 = vmatpush2.msra.mxu0 0.0
    %115 = vmatprep.subr.mxu0 0.0
    %116 = vmatpush2.msra.mxu0 0.0
    %117 = vmatprep.subr.mxu0 0.0
    %118 = vmatpush2.msra.mxu0 0.0
    %119 = vmatprep.subr.mxu0 0.0
    %120 = vmatpush2.msra.mxu0 0.0
    %121 = vmatprep.mubr.f32.mxu0 0.0
    %122 = vmatmul.mubr.f32.gmra.mxu0 %v52
    %v123 = vpop.f32.mrf.mxu0
    %v124 = vadd.f32 0.0, %v123
    %v125 = vpop.f32.mrf.mxu0
    %126 = vmatprep.mubr.f32.mxu0 0.0
    %127 = vmatmul.mubr.f32.gmra.mxu0 %v55
    %v128 = vpop.f32.mrf.mxu0
    %v129 = vadd.f32 0.0, %v128
    %v130 = vpop.f32.mrf.mxu0
    %131 = vdwg.mxu0
    %132 = vst [vmem:[#allocation5] sm:$0xff] %v124
    %133 = vst [vmem:[#allocation5 + $0x8] sm:$0xff] %v129
    // Predicated region
    $region14: #{tpu_custom_call.1} parent=1 // pred_check
      _
    $region15: #{tpu_custom_call.1} parent=1 // pred_check_branch
      %135 = sbr.rel (0) target = $region17
    $region16: #{tpu_custom_call.1} parent=1 // pred_region
      %s137 = ssub.s32 256, 256
      %138 = vsyncadd [#allocation4], %s137
      %s139 = sshll.u32 [#allocation5], 4
      %s140 = int_to_ptr.vmem [resolvable:$true] %s139
      %145 = dma.vmem_to_hbm [thread:$0]  %s140, 256, %s2, [#allocation4], 128, 128, 8
    $region17: #{tpu_custom_call.1} parent=1 // pred_fallthru
      _
    // Predicated region
    $region18: #{tpu_custom_call.1} parent=1 // pred_check
      _
    $region19: #{tpu_custom_call.1} parent=1 // pred_check_branch
      %147 = sbr.rel (0) target = $region21
    $region20: #{tpu_custom_call.1} parent=1 // pred_region
      %148 = dma.done [#allocation4], 256
    $region21: #{tpu_custom_call.1} parent=1 // pred_fallthru
      _
    %149 = vsyncpa [#allocation3], 1
    %150 = vsyncpa [#allocation4], 1

// kernel: tpu_custom_call.1
$region0: #{tpu_custom_call.1}
  #allocation0 [shape = 'u32[]', space=smem, size = 0x4, offset = 0x4, fixed_abs, tag = 'smem constant byte address 0x4 - core index']
  #allocation1 [shape = 'u32[144,128]{1,0:T(1,128)}', space=vmem, size = 0x12000, scoped, tag = 'internal scratch']
  %s0 = inlined_call_operand.vmem [shape: s32[16,1], index: 0, kind: input, shape index: {}]
  %s1 = inlined_call_operand.hbm [shape: f32[64,128], index: 1, kind: input, shape index: {}]
  %s2 = inlined_call_operand.hbm [shape: f32[16,128], index: 2, kind: output, shape index: {}]
  %s3 = sld [smem:[#allocation0]]
  $region22: #{tpu_custom_call.1} parent=0
    _
  %s5 = ssub.s32 1, %s3
  %s6 = scalar_select 0, %s5, %s3
  $region1: #{tpu_custom_call.1} parent=0
    #allocation2 [shape = 'u8[32768]{0}', space=vmem, size = 0x8000, scoped, tag = 'input window, operand 1, single buffered']
    #allocation3 [shape = 's32[1]{0}', space=sflag, size = 0x4, scoped, tag = 'scoped memory for tpu_custom_call.1']
    #allocation4 [shape = 's32[1]{0}', space=sflag, size = 0x4, scoped, tag = 'scoped memory for tpu_custom_call.1']
    #allocation5 [shape = 'u8[8192]{0}', space=vmem, size = 0x2000, scoped, tag = 'output window, operand 0, single buffered']
    %7 = vsyncpa [#allocation3], 0
    %8 = vsyncpa [#allocation4], 0
    // Predicated region
    $region2: #{tpu_custom_call.1} parent=1 // pred_check
      _
    $region3: #{tpu_custom_call.1} parent=1 // pred_check_branch
      %10 = sbr.rel (0) target = $region5
    $region4: #{tpu_custom_call.1} parent=1 // pred_region
      _
    $region5: #{tpu_custom_call.1} parent=1 // pred_fallthru
      _
    // Predicated region
    $region6: #{tpu_custom_call.1} parent=1 // pred_check
      _
    $region7: #{tpu_custom_call.1} parent=1 // pred_check_branch
      %12 = sbr.rel (0) target = $region9
    $region8: #{tpu_custom_call.1} parent=1 // pred_region
      %s14 = ssub.s32 1024, 1024
      %15 = vsyncadd [#allocation3], %s14
      %s16 = sshll.u32 [#allocation2], 4
      %s17 = int_to_ptr.vmem [resolvable:$true] %s16
      %22 = dma.hbm_to_vmem [thread:$0]  %s1, 1024, %s17, [#allocation3], 128, 128, 8
    $region9: #{tpu_custom_call.1} parent=1 // pred_fallthru
      _
    // Predicated region
    $region10: #{tpu_custom_call.1} parent=1 // pred_check
      _
    $region11: #{tpu_custom_call.1} parent=1 // pred_check_branch
      %24 = sbr.rel (0) target = $region13
    $region12: #{tpu_custom_call.1} parent=1 // pred_region
      %25 = dma.done [#allocation3], 1024
    $region13: #{tpu_custom_call.1} parent=1 // pred_fallthru
      _
    %v26 = vld [vmem:[%s0] sm:$0xff]
    %v27 = vld [vmem:[%s0 + $0x8] sm:$0xff]
    %v28 = vlaneseq
    %v29 = vand.u32 %v28, 127
    %30 = vset.pattern.permute.xlu0 0
    %31 = vperm.xlu0 %30, %v26
    %v32 = vpop.permute.xlu0 %31
    %33 = vset.pattern.permute.xlu0 0
    %34 = vperm.xlu0 %33, %v27
    %v35 = vpop.permute.xlu0 %34
    %vm36 = vcmp.eq.s32.totalorder %v32, %v29
    %vm37 = vcmp.eq.s32.totalorder %v35, %v29
    %v38 = vsel %vm36, 1, 0
    %v39 = vsel %vm37, 1, 0
    %v40 = vcvt.s32.f32 %v38
    %v41 = vcvt.s32.f32 %v39
    %v42 = vld [vmem:[#allocation2] sm:$0xff]
    %v43 = vld [vmem:[#allocation2 + $0x8] sm:$0xff]
    %v44 = vld [vmem:[#allocation2 + $0x10] sm:$0xff]
    %v45 = vld [vmem:[#allocation2 + $0x18] sm:$0xff]
    %v46 = vld [vmem:[#allocation2 + $0x20] sm:$0xff]
    %v47 = vld [vmem:[#allocation2 + $0x28] sm:$0xff]
    %v48 = vld [vmem:[#allocation2 + $0x30] sm:$0xff]
    %v49 = vld [vmem:[#allocation2 + $0x38] sm:$0xff]
    %vm50 = vcmask 523264
    %v52 = vsel %vm50, %v40, 0
    %v55 = vsel %vm50, %v41, 0
    %57 = vmatprep.subr.mxu0 0.0
    %58 = vmatpush1.msra.mxu0 0.0
    %59 = vmatprep.subr.mxu0 0.0
    %60 = vmatpush1.msra.mxu0 0.0
    %61 = vmatprep.subr.mxu0 0.0
    %62 = vmatpush1.msra.mxu0 0.0
    %63 = vmatprep.subr.mxu0 0.0
    %64 = vmatpush1.msra.mxu0 0.0
    %65 = vmatprep.subr.mxu0 0.0
    %66 = vmatpush1.msra.mxu0 0.0
    %67 = vmatprep.subr.mxu0 0.0
    %68 = vmatpush1.msra.mxu0 0.0
    %69 = vmatprep.subr.mxu0 0.0
    %70 = vmatpush1.msra.mxu0 0.0
    %71 = vmatprep.subr.mxu0 0.0
    %72 = vmatpush1.msra.mxu0 0.0
    %73 = vmatprep.subr.mxu0 0.0
    %74 = vmatpush1.msra.mxu0 %v49
    %75 = vmatprep.subr.mxu0 0.0
    %76 = vmatpush1.msra.mxu0 %v48
    %77 = vmatprep.subr.mxu0 0.0
    %78 = vmatpush1.msra.mxu0 %v47
    %79 = vmatprep.subr.mxu0 0.0
    %80 = vmatpush1.msra.mxu0 %v46
    %81 = vmatprep.subr.mxu0 0.0
    %82 = vmatpush1.msra.mxu0 %v45
    %83 = vmatprep.subr.mxu0 0.0
    %84 = vmatpush1.msra.mxu0 %v44
    %85 = vmatprep.subr.mxu0 0.0
    %86 = vmatpush1.msra.mxu0 %v43
    %87 = vmatprep.subr.mxu0 0.0
    %88 = vmatpush1.msra.mxu0 %v42
    %89 = vmatprep.subr.mxu0 0.0
    %90 = vmatpush2.msra.mxu0 0.0
    %91 = vmatprep.subr.mxu0 0.0
    %92 = vmatpush2.msra.mxu0 0.0
    %93 = vmatprep.subr.mxu0 0.0
    %94 = vmatpush2.msra.mxu0 0.0
    %95 = vmatprep.subr.mxu0 0.0
    %96 = vmatpush2.msra.mxu0 0.0
    %97 = vmatprep.subr.mxu0 0.0
    %98 = vmatpush2.msra.mxu0 0.0
    %99 = vmatprep.subr.mxu0 0.0
    %100 = vmatpush2.msra.mxu0 0.0
    %101 = vmatprep.subr.mxu0 0.0
    %102 = vmatpush2.msra.mxu0 0.0
    %103 = vmatprep.subr.mxu0 0.0
    %104 = vmatpush2.msra.mxu0 0.0
    %105 = vmatprep.subr.mxu0 0.0
    %106 = vmatpush2.msra.mxu0 0.0
    %107 = vmatprep.subr.mxu0 0.0
    %108 = vmatpush2.msra.mxu0 0.0
    %109 = vmatprep.subr.mxu0 0.0
    %110 = vmatpush2.msra.mxu0 0.0
    %111 = vmatprep.subr.mxu0 0.0
    %112 = vmatpush2.msra.mxu0 0.0
    %113 = vmatprep.subr.mxu0 0.0
    %114 = vmatpush2.msra.mxu0 0.0
    %115 = vmatprep.subr.mxu0 0.0
    %116 = vmatpush2.msra.mxu0 0.0
    %117 = vmatprep.subr.mxu0 0.0
    %118 = vmatpush2.msra.mxu0 0.0
    %119 = vmatprep.subr.mxu0 0.0
    %120 = vmatpush2.msra.mxu0 0.0
    %121 = vmatprep.mubr.f32.mxu0 0.0
    %122 = vmatmul.mubr.f32.gmra.mxu0 %v52
    %v123 = vpop.f32.mrf.mxu0
    %v124 = vadd.f32 0.0, %v123
    %v125 = vpop.f32.mrf.mxu0
    %126 = vmatprep.mubr.f32.mxu0 0.0
    %127 = vmatmul.mubr.f32.gmra.mxu0 %v55
    %v128 = vpop.f32.mrf.mxu0
    %v129 = vadd.f32 0.0, %v128
    %v130 = vpop.f32.mrf.mxu0
    %131 = vdwg.mxu0
    %132 = vst [vmem:[#allocation5] sm:$0xff] %v124
    %133 = vst [vmem:[#allocation5 + $0x8] sm:$0xff] %v129
    // Predicated region
    $region14: #{tpu_custom_call.1} parent=1 // pred_check
      _
    $region15: #{tpu_custom_call.1} parent=1 // pred_check_branch
      %135 = sbr.rel (0) target = $region17
    $region16: #{tpu_custom_call.1} parent=1 // pred_region
      %s137 = ssub.s32 256, 256
      %138 = vsyncadd [#allocation4], %s137
      %s139 = sshll.u32 [#allocation5], 4
      %s140 = int_to_ptr.vmem [resolvable:$true] %s139
      %145 = dma.vmem_to_hbm [thread:$0]  %s140, 256, %s2, [#allocation4], 128, 128, 8
    $region17: #{tpu_custom_call.1} parent=1 // pred_fallthru
      _
    // Predicated region
    $region18: #{tpu_custom_call.1} parent=1 // pred_check
      _
    $region19: #{tpu_custom_call.1} parent=1 // pred_check_branch
      %147 = sbr.rel (0) target = $region21
    $region20: #{tpu_custom_call.1} parent=1 // pred_region
      %148 = dma.done [#allocation4], 256
    $region21: #{tpu_custom_call.1} parent=1 // pred_fallthru
      _
    %149 = vsyncpa [#allocation3], 1
    %150 = vsyncpa [#allocation4], 1

</llo_original>
